<compile_context>
chip_gen: v7x
topology: tpu7x:2x2x1
jax: 0.10.0
libtpu: 0.0.40
codegen_flags: <defaults>
</compile_context>

<pallas_src>
import functools

import jax
import jax.numpy as jnp
from jax.experimental import pallas as pl
from jax.experimental.pallas import tpu as pltpu

KH = KW = 3     # conv kernel size
COUT = 3        # out channels per conv
NCONV = 4       # number of convs / inputs


def _fused_conv_kernel(xp_ref, wv_ref, bv_ref, o_ref, *, img_w):
    """All four Conv2d(1, 3, 3x3, VALID) fused, lane-dense, sublane-packed.

    xp_ref : VMEM (R, HW + PAD)  R = NCONV*B rows, each a flattened H*W image
                                 zero-padded by PAD lanes (native input dtype).
    wv_ref : VMEM (KH*KW, COUT, R, 1) f32, per-tap / per-channel / per-row weights.
    bv_ref : VMEM (COUT, R, 1) f32, per-channel / per-row biases.
    o_ref  : VMEM (COUT, R, HW) f32, lane-dense output slabs.
    """
    hw = o_ref.shape[2]
    ntap = wv_ref.shape[0]
    cout = wv_ref.shape[1]

    accs = [None] * cout
    # Taps outer: exactly one shifted window live at a time, reused across the
    # COUT independent accumulator chains (good VALU ILP, low vreg pressure).
    for t in range(ntap):
        shift = (t // KW) * img_w + (t % KW)
        win = xp_ref[:, shift:shift + hw].astype(jnp.float32)   # (R, HW)
        for c in range(cout):
            w_tc = wv_ref[t, c, :, :]                           # (R, 1) column
            term = win * w_tc                                   # lane-bcast mul
            accs[c] = term if t == 0 else accs[c] + term

    # Streaming dense stores (no stack / second output copy).
    for c in range(cout):
        o_ref[c, :, :] = accs[c] + bv_ref[c, :, :]


def mixed_precision_multiple_inputs_net(x, y, z, w, weights, biases):
    """x, y, z, w: (B, 1, H, W) NCHW (any float dtype; upcast in-kernel).
    weights: (NCONV, COUT, 1, KH, KW) float32 (stacked OIHW).
    biases : (NCONV, COUT) float32.
    Returns (B, NCONV*COUT, H-2, W-2) float32 NCHW == torch.concat(dim=1).
    """
    B, Cin, H, W_ = x.shape
    assert Cin == 1
    Ho, Wo = H - KH + 1, W_ - KW + 1
    HW = H * W_
    PAD = (KH - 1) * W_ + (KW - 1)          # max tap shift
    R = NCONV * B

    # ---- wrapper-side layout plumbing (cheap XLA ops on tiny arrays) -------
    # Rows r = conv_i * B + b, each row a flattened image, zero-padded so every
    # tap is a static in-bounds lane slice. Native dtype (no f32 force-cast).
    xs = jnp.stack([x, y, z, w], axis=0).reshape(R, HW)
    xs = jnp.pad(xs, ((0, 0), (0, PAD)))                        # (R, HW+PAD)

    # wv[t, c, i*B + b, 0] = weights[i, c, 0, t//KW, t%KW]
    w3 = jnp.transpose(weights.reshape(NCONV, COUT, KH * KW).astype(jnp.float32),
                       (2, 1, 0))                               # (9, COUT, NCONV)
    wv = jnp.broadcast_to(w3[:, :, :, None], (KH * KW, COUT, NCONV, B))
    wv = wv.reshape(KH * KW, COUT, R, 1)

    # bv[c, i*B + b, 0] = biases[i, c]
    bv = jnp.broadcast_to(biases.T.astype(jnp.float32)[:, :, None],
                          (COUT, NCONV, B)).reshape(COUT, R, 1)

    out = pl.pallas_call(
        functools.partial(_fused_conv_kernel, img_w=W_),
        out_shape=jax.ShapeDtypeStruct((COUT, R, HW), jnp.float32),
        in_specs=[
            pl.BlockSpec(memory_space=pltpu.MemorySpace.VMEM),   # packed inputs
            pl.BlockSpec(memory_space=pltpu.MemorySpace.VMEM),   # weight columns
            pl.BlockSpec(memory_space=pltpu.MemorySpace.VMEM),   # bias columns
        ],
        out_specs=pl.BlockSpec(memory_space=pltpu.MemorySpace.VMEM),
    )(xs, wv, bv)

    # Un-pack to NCHW and drop the garbage border (positions >= Ho/Wo were
    # computed into padding and are simply discarded here).
    out = out.reshape(COUT, NCONV, B, H, W_).transpose(2, 1, 0, 3, 4)
    out = out.reshape(B, NCONV * COUT, H, W_)[:, :, :Ho, :Wo]
    return out


def _reference(x, y, z, w, weights, biases):
    """Pure-JAX reference using lax.conv (NCHW / OIHW)."""
    outs = []
    for i, inp in enumerate((x, y, z, w)):
        o = jax.lax.conv_general_dilated(
            inp.astype(jnp.float32), weights[i].astype(jnp.float32),
            window_strides=(1, 1), padding="VALID",
            dimension_numbers=("NCHW", "OIHW", "NCHW"))
        outs.append(o + biases[i][None, :, None, None])
    return jnp.concatenate(outs, axis=1)


if __name__ == "__main__":
    key = jax.random.PRNGKey(0)
    B, H, W_ = 2, 16, 16

    k_in, k_w, k_b = jax.random.split(key, 3)
    kx, ky, kz, kw_ = jax.random.split(k_in, 4)
    x = jax.random.normal(kx, (B, 1, H, W_), jnp.float32)
    y = jax.random.normal(ky, (B, 1, H, W_), jnp.float32)
    z = jax.random.normal(kz, (B, 1, H, W_), jnp.float32)
    w_in = jax.random.normal(kw_, (B, 1, H, W_), jnp.float32)

    # Deterministic init mimicking torch Conv2d default
    # (uniform in [-1/sqrt(fan_in), 1/sqrt(fan_in)], fan_in = 1*3*3 = 9).
    bound = 1.0 / jnp.sqrt(9.0)
    weights = jax.random.uniform(k_w, (NCONV, COUT, 1, KH, KW),
                                 jnp.float32, -bound, bound)
    biases = jax.random.uniform(k_b, (NCONV, COUT), jnp.float32, -bound, bound)

    out = mixed_precision_multiple_inputs_net(x, y, z, w_in, weights, biases)
    out = jax.block_until_ready(out)

    ref = _reference(x, y, z, w_in, weights, biases)
    assert out.shape == (B, NCONV * COUT, H - 2, W_ - 2), out.shape
    assert jnp.allclose(out, ref, atol=1e-5, rtol=1e-5), \
        float(jnp.max(jnp.abs(out - ref)))

    print("KERNEL_OK")
</pallas_src>

<mosaic_0001>
module attributes {stable_mosaic.version = 11 : i64} {
  func.func @_fused_conv_kernel(%arg0: memref<8x290xf32, #tpu.memory_space<vmem>>, %arg1: memref<9x3x8x1xf32, #tpu.memory_space<vmem>>, %arg2: memref<3x8x1xf32, #tpu.memory_space<vmem>>, %arg3: memref<3x8x256xf32, #tpu.memory_space<vmem>>) attributes {dimension_semantics = [], scalar_prefetch = 0 : i64, scratch_operands = 0 : i64, tpu.core_type = #tpu.core_type<tc>} {
    %c0 = arith.constant 0 : index
    %c0_0 = arith.constant 0 : index
    %0 = vector.load %arg0[%c0, %c0_0] : memref<8x290xf32, #tpu.memory_space<vmem>>, vector<8x256xf32>
    %c0_1 = arith.constant 0 : index
    %c0_2 = arith.constant 0 : index
    %c0_3 = arith.constant 0 : index
    %c0_4 = arith.constant 0 : index
    %1 = vector.load %arg1[%c0_1, %c0_2, %c0_3, %c0_4] : memref<9x3x8x1xf32, #tpu.memory_space<vmem>>, vector<1x1x8x1xf32>
    %2 = vector.shape_cast %1 : vector<1x1x8x1xf32> to vector<8x1xf32>
    %3 = vector.broadcast %2 : vector<8x1xf32> to vector<8x256xf32>
    %4 = arith.mulf %0, %3 : vector<8x256xf32>
    %c0_5 = arith.constant 0 : index
    %c1 = arith.constant 1 : index
    %c0_6 = arith.constant 0 : index
    %c0_7 = arith.constant 0 : index
    %5 = vector.load %arg1[%c0_5, %c1, %c0_6, %c0_7] : memref<9x3x8x1xf32, #tpu.memory_space<vmem>>, vector<1x1x8x1xf32>
    %6 = vector.shape_cast %5 : vector<1x1x8x1xf32> to vector<8x1xf32>
    %7 = vector.broadcast %6 : vector<8x1xf32> to vector<8x256xf32>
    %8 = arith.mulf %0, %7 : vector<8x256xf32>
    %c0_8 = arith.constant 0 : index
    %c2 = arith.constant 2 : index
    %c0_9 = arith.constant 0 : index
    %c0_10 = arith.constant 0 : index
    %9 = vector.load %arg1[%c0_8, %c2, %c0_9, %c0_10] : memref<9x3x8x1xf32, #tpu.memory_space<vmem>>, vector<1x1x8x1xf32>
    %10 = vector.shape_cast %9 : vector<1x1x8x1xf32> to vector<8x1xf32>
    %11 = vector.broadcast %10 : vector<8x1xf32> to vector<8x256xf32>
    %12 = arith.mulf %0, %11 : vector<8x256xf32>
    %c0_11 = arith.constant 0 : index
    %c1_12 = arith.constant 1 : index
    %13 = vector.load %arg0[%c0_11, %c1_12] : memref<8x290xf32, #tpu.memory_space<vmem>>, vector<8x256xf32>
    %c1_13 = arith.constant 1 : index
    %c0_14 = arith.constant 0 : index
    %c0_15 = arith.constant 0 : index
    %c0_16 = arith.constant 0 : index
    %14 = vector.load %arg1[%c1_13, %c0_14, %c0_15, %c0_16] : memref<9x3x8x1xf32, #tpu.memory_space<vmem>>, vector<1x1x8x1xf32>
    %15 = vector.shape_cast %14 : vector<1x1x8x1xf32> to vector<8x1xf32>
    %16 = vector.broadcast %15 : vector<8x1xf32> to vector<8x256xf32>
    %17 = arith.mulf %13, %16 : vector<8x256xf32>
    %18 = arith.addf %4, %17 : vector<8x256xf32>
    %c1_17 = arith.constant 1 : index
    %c1_18 = arith.constant 1 : index
    %c0_19 = arith.constant 0 : index
    %c0_20 = arith.constant 0 : index
    %19 = vector.load %arg1[%c1_17, %c1_18, %c0_19, %c0_20] : memref<9x3x8x1xf32, #tpu.memory_space<vmem>>, vector<1x1x8x1xf32>
    %20 = vector.shape_cast %19 : vector<1x1x8x1xf32> to vector<8x1xf32>
    %21 = vector.broadcast %20 : vector<8x1xf32> to vector<8x256xf32>
    %22 = arith.mulf %13, %21 : vector<8x256xf32>
    %23 = arith.addf %8, %22 : vector<8x256xf32>
    %c1_21 = arith.constant 1 : index
    %c2_22 = arith.constant 2 : index
    %c0_23 = arith.constant 0 : index
    %c0_24 = arith.constant 0 : index
    %24 = vector.load %arg1[%c1_21, %c2_22, %c0_23, %c0_24] : memref<9x3x8x1xf32, #tpu.memory_space<vmem>>, vector<1x1x8x1xf32>
    %25 = vector.shape_cast %24 : vector<1x1x8x1xf32> to vector<8x1xf32>
    %26 = vector.broadcast %25 : vector<8x1xf32> to vector<8x256xf32>
    %27 = arith.mulf %13, %26 : vector<8x256xf32>
    %28 = arith.addf %12, %27 : vector<8x256xf32>
    %c0_25 = arith.constant 0 : index
    %c2_26 = arith.constant 2 : index
    %29 = vector.load %arg0[%c0_25, %c2_26] : memref<8x290xf32, #tpu.memory_space<vmem>>, vector<8x256xf32>
    %c2_27 = arith.constant 2 : index
    %c0_28 = arith.constant 0 : index
    %c0_29 = arith.constant 0 : index
    %c0_30 = arith.constant 0 : index
    %30 = vector.load %arg1[%c2_27, %c0_28, %c0_29, %c0_30] : memref<9x3x8x1xf32, #tpu.memory_space<vmem>>, vector<1x1x8x1xf32>
    %31 = vector.shape_cast %30 : vector<1x1x8x1xf32> to vector<8x1xf32>
    %32 = vector.broadcast %31 : vector<8x1xf32> to vector<8x256xf32>
    %33 = arith.mulf %29, %32 : vector<8x256xf32>
    %34 = arith.addf %18, %33 : vector<8x256xf32>
    %c2_31 = arith.constant 2 : index
    %c1_32 = arith.constant 1 : index
    %c0_33 = arith.constant 0 : index
    %c0_34 = arith.constant 0 : index
    %35 = vector.load %arg1[%c2_31, %c1_32, %c0_33, %c0_34] : memref<9x3x8x1xf32, #tpu.memory_space<vmem>>, vector<1x1x8x1xf32>
    %36 = vector.shape_cast %35 : vector<1x1x8x1xf32> to vector<8x1xf32>
    %37 = vector.broadcast %36 : vector<8x1xf32> to vector<8x256xf32>
    %38 = arith.mulf %29, %37 : vector<8x256xf32>
    %39 = arith.addf %23, %38 : vector<8x256xf32>
    %c2_35 = arith.constant 2 : index
    %c2_36 = arith.constant 2 : index
    %c0_37 = arith.constant 0 : index
    %c0_38 = arith.constant 0 : index
    %40 = vector.load %arg1[%c2_35, %c2_36, %c0_37, %c0_38] : memref<9x3x8x1xf32, #tpu.memory_space<vmem>>, vector<1x1x8x1xf32>
    %41 = vector.shape_cast %40 : vector<1x1x8x1xf32> to vector<8x1xf32>
    %42 = vector.broadcast %41 : vector<8x1xf32> to vector<8x256xf32>
    %43 = arith.mulf %29, %42 : vector<8x256xf32>
    %44 = arith.addf %28, %43 : vector<8x256xf32>
    %c0_39 = arith.constant 0 : index
    %c16 = arith.constant 16 : index
    %45 = vector.load %arg0[%c0_39, %c16] : memref<8x290xf32, #tpu.memory_space<vmem>>, vector<8x256xf32>
    %c3 = arith.constant 3 : index
    %c0_40 = arith.constant 0 : index
    %c0_41 = arith.constant 0 : index
    %c0_42 = arith.constant 0 : index
    %46 = vector.load %arg1[%c3, %c0_40, %c0_41, %c0_42] : memref<9x3x8x1xf32, #tpu.memory_space<vmem>>, vector<1x1x8x1xf32>
    %47 = vector.shape_cast %46 : vector<1x1x8x1xf32> to vector<8x1xf32>
    %48 = vector.broadcast %47 : vector<8x1xf32> to vector<8x256xf32>
    %49 = arith.mulf %45, %48 : vector<8x256xf32>
    %50 = arith.addf %34, %49 : vector<8x256xf32>
    %c3_43 = arith.constant 3 : index
    %c1_44 = arith.constant 1 : index
    %c0_45 = arith.constant 0 : index
    %c0_46 = arith.constant 0 : index
    %51 = vector.load %arg1[%c3_43, %c1_44, %c0_45, %c0_46] : memref<9x3x8x1xf32, #tpu.memory_space<vmem>>, vector<1x1x8x1xf32>
    %52 = vector.shape_cast %51 : vector<1x1x8x1xf32> to vector<8x1xf32>
    %53 = vector.broadcast %52 : vector<8x1xf32> to vector<8x256xf32>
    %54 = arith.mulf %45, %53 : vector<8x256xf32>
    %55 = arith.addf %39, %54 : vector<8x256xf32>
    %c3_47 = arith.constant 3 : index
    %c2_48 = arith.constant 2 : index
    %c0_49 = arith.constant 0 : index
    %c0_50 = arith.constant 0 : index
    %56 = vector.load %arg1[%c3_47, %c2_48, %c0_49, %c0_50] : memref<9x3x8x1xf32, #tpu.memory_space<vmem>>, vector<1x1x8x1xf32>
    %57 = vector.shape_cast %56 : vector<1x1x8x1xf32> to vector<8x1xf32>
    %58 = vector.broadcast %57 : vector<8x1xf32> to vector<8x256xf32>
    %59 = arith.mulf %45, %58 : vector<8x256xf32>
    %60 = arith.addf %44, %59 : vector<8x256xf32>
    %c0_51 = arith.constant 0 : index
    %c17 = arith.constant 17 : index
    %61 = vector.load %arg0[%c0_51, %c17] : memref<8x290xf32, #tpu.memory_space<vmem>>, vector<8x256xf32>
    %c4 = arith.constant 4 : index
    %c0_52 = arith.constant 0 : index
    %c0_53 = arith.constant 0 : index
    %c0_54 = arith.constant 0 : index
    %62 = vector.load %arg1[%c4, %c0_52, %c0_53, %c0_54] : memref<9x3x8x1xf32, #tpu.memory_space<vmem>>, vector<1x1x8x1xf32>
    %63 = vector.shape_cast %62 : vector<1x1x8x1xf32> to vector<8x1xf32>
    %64 = vector.broadcast %63 : vector<8x1xf32> to vector<8x256xf32>
    %65 = arith.mulf %61, %64 : vector<8x256xf32>
    %66 = arith.addf %50, %65 : vector<8x256xf32>
    %c4_55 = arith.constant 4 : index
    %c1_56 = arith.constant 1 : index
    %c0_57 = arith.constant 0 : index
    %c0_58 = arith.constant 0 : index
    %67 = vector.load %arg1[%c4_55, %c1_56, %c0_57, %c0_58] : memref<9x3x8x1xf32, #tpu.memory_space<vmem>>, vector<1x1x8x1xf32>
    %68 = vector.shape_cast %67 : vector<1x1x8x1xf32> to vector<8x1xf32>
    %69 = vector.broadcast %68 : vector<8x1xf32> to vector<8x256xf32>
    %70 = arith.mulf %61, %69 : vector<8x256xf32>
    %71 = arith.addf %55, %70 : vector<8x256xf32>
    %c4_59 = arith.constant 4 : index
    %c2_60 = arith.constant 2 : index
    %c0_61 = arith.constant 0 : index
    %c0_62 = arith.constant 0 : index
    %72 = vector.load %arg1[%c4_59, %c2_60, %c0_61, %c0_62] : memref<9x3x8x1xf32, #tpu.memory_space<vmem>>, vector<1x1x8x1xf32>
    %73 = vector.shape_cast %72 : vector<1x1x8x1xf32> to vector<8x1xf32>
    %74 = vector.broadcast %73 : vector<8x1xf32> to vector<8x256xf32>
    %75 = arith.mulf %61, %74 : vector<8x256xf32>
    %76 = arith.addf %60, %75 : vector<8x256xf32>
    %c0_63 = arith.constant 0 : index
    %c18 = arith.constant 18 : index
    %77 = vector.load %arg0[%c0_63, %c18] : memref<8x290xf32, #tpu.memory_space<vmem>>, vector<8x256xf32>
    %c5 = arith.constant 5 : index
    %c0_64 = arith.constant 0 : index
    %c0_65 = arith.constant 0 : index
    %c0_66 = arith.constant 0 : index
    %78 = vector.load %arg1[%c5, %c0_64, %c0_65, %c0_66] : memref<9x3x8x1xf32, #tpu.memory_space<vmem>>, vector<1x1x8x1xf32>
    %79 = vector.shape_cast %78 : vector<1x1x8x1xf32> to vector<8x1xf32>
    %80 = vector.broadcast %79 : vector<8x1xf32> to vector<8x256xf32>
    %81 = arith.mulf %77, %80 : vector<8x256xf32>
    %82 = arith.addf %66, %81 : vector<8x256xf32>
    %c5_67 = arith.constant 5 : index
    %c1_68 = arith.constant 1 : index
    %c0_69 = arith.constant 0 : index
    %c0_70 = arith.constant 0 : index
    %83 = vector.load %arg1[%c5_67, %c1_68, %c0_69, %c0_70] : memref<9x3x8x1xf32, #tpu.memory_space<vmem>>, vector<1x1x8x1xf32>
    %84 = vector.shape_cast %83 : vector<1x1x8x1xf32> to vector<8x1xf32>
    %85 = vector.broadcast %84 : vector<8x1xf32> to vector<8x256xf32>
    %86 = arith.mulf %77, %85 : vector<8x256xf32>
    %87 = arith.addf %71, %86 : vector<8x256xf32>
    %c5_71 = arith.constant 5 : index
    %c2_72 = arith.constant 2 : index
    %c0_73 = arith.constant 0 : index
    %c0_74 = arith.constant 0 : index
    %88 = vector.load %arg1[%c5_71, %c2_72, %c0_73, %c0_74] : memref<9x3x8x1xf32, #tpu.memory_space<vmem>>, vector<1x1x8x1xf32>
    %89 = vector.shape_cast %88 : vector<1x1x8x1xf32> to vector<8x1xf32>
    %90 = vector.broadcast %89 : vector<8x1xf32> to vector<8x256xf32>
    %91 = arith.mulf %77, %90 : vector<8x256xf32>
    %92 = arith.addf %76, %91 : vector<8x256xf32>
    %c0_75 = arith.constant 0 : index
    %c32 = arith.constant 32 : index
    %93 = vector.load %arg0[%c0_75, %c32] : memref<8x290xf32, #tpu.memory_space<vmem>>, vector<8x256xf32>
    %c6 = arith.constant 6 : index
    %c0_76 = arith.constant 0 : index
    %c0_77 = arith.constant 0 : index
    %c0_78 = arith.constant 0 : index
    %94 = vector.load %arg1[%c6, %c0_76, %c0_77, %c0_78] : memref<9x3x8x1xf32, #tpu.memory_space<vmem>>, vector<1x1x8x1xf32>
    %95 = vector.shape_cast %94 : vector<1x1x8x1xf32> to vector<8x1xf32>
    %96 = vector.broadcast %95 : vector<8x1xf32> to vector<8x256xf32>
    %97 = arith.mulf %93, %96 : vector<8x256xf32>
    %98 = arith.addf %82, %97 : vector<8x256xf32>
    %c6_79 = arith.constant 6 : index
    %c1_80 = arith.constant 1 : index
    %c0_81 = arith.constant 0 : index
    %c0_82 = arith.constant 0 : index
    %99 = vector.load %arg1[%c6_79, %c1_80, %c0_81, %c0_82] : memref<9x3x8x1xf32, #tpu.memory_space<vmem>>, vector<1x1x8x1xf32>
    %100 = vector.shape_cast %99 : vector<1x1x8x1xf32> to vector<8x1xf32>
    %101 = vector.broadcast %100 : vector<8x1xf32> to vector<8x256xf32>
    %102 = arith.mulf %93, %101 : vector<8x256xf32>
    %103 = arith.addf %87, %102 : vector<8x256xf32>
    %c6_83 = arith.constant 6 : index
    %c2_84 = arith.constant 2 : index
    %c0_85 = arith.constant 0 : index
    %c0_86 = arith.constant 0 : index
    %104 = vector.load %arg1[%c6_83, %c2_84, %c0_85, %c0_86] : memref<9x3x8x1xf32, #tpu.memory_space<vmem>>, vector<1x1x8x1xf32>
    %105 = vector.shape_cast %104 : vector<1x1x8x1xf32> to vector<8x1xf32>
    %106 = vector.broadcast %105 : vector<8x1xf32> to vector<8x256xf32>
    %107 = arith.mulf %93, %106 : vector<8x256xf32>
    %108 = arith.addf %92, %107 : vector<8x256xf32>
    %c0_87 = arith.constant 0 : index
    %c33 = arith.constant 33 : index
    %109 = vector.load %arg0[%c0_87, %c33] : memref<8x290xf32, #tpu.memory_space<vmem>>, vector<8x256xf32>
    %c7 = arith.constant 7 : index
    %c0_88 = arith.constant 0 : index
    %c0_89 = arith.constant 0 : index
    %c0_90 = arith.constant 0 : index
    %110 = vector.load %arg1[%c7, %c0_88, %c0_89, %c0_90] : memref<9x3x8x1xf32, #tpu.memory_space<vmem>>, vector<1x1x8x1xf32>
    %111 = vector.shape_cast %110 : vector<1x1x8x1xf32> to vector<8x1xf32>
    %112 = vector.broadcast %111 : vector<8x1xf32> to vector<8x256xf32>
    %113 = arith.mulf %109, %112 : vector<8x256xf32>
    %114 = arith.addf %98, %113 : vector<8x256xf32>
    %c7_91 = arith.constant 7 : index
    %c1_92 = arith.constant 1 : index
    %c0_93 = arith.constant 0 : index
    %c0_94 = arith.constant 0 : index
    %115 = vector.load %arg1[%c7_91, %c1_92, %c0_93, %c0_94] : memref<9x3x8x1xf32, #tpu.memory_space<vmem>>, vector<1x1x8x1xf32>
    %116 = vector.shape_cast %115 : vector<1x1x8x1xf32> to vector<8x1xf32>
    %117 = vector.broadcast %116 : vector<8x1xf32> to vector<8x256xf32>
    %118 = arith.mulf %109, %117 : vector<8x256xf32>
    %119 = arith.addf %103, %118 : vector<8x256xf32>
    %c7_95 = arith.constant 7 : index
    %c2_96 = arith.constant 2 : index
    %c0_97 = arith.constant 0 : index
    %c0_98 = arith.constant 0 : index
    %120 = vector.load %arg1[%c7_95, %c2_96, %c0_97, %c0_98] : memref<9x3x8x1xf32, #tpu.memory_space<vmem>>, vector<1x1x8x1xf32>
    %121 = vector.shape_cast %120 : vector<1x1x8x1xf32> to vector<8x1xf32>
    %122 = vector.broadcast %121 : vector<8x1xf32> to vector<8x256xf32>
    %123 = arith.mulf %109, %122 : vector<8x256xf32>
    %124 = arith.addf %108, %123 : vector<8x256xf32>
    %c0_99 = arith.constant 0 : index
    %c34 = arith.constant 34 : index
    %125 = vector.load %arg0[%c0_99, %c34] : memref<8x290xf32, #tpu.memory_space<vmem>>, vector<8x256xf32>
    %c8 = arith.constant 8 : index
    %c0_100 = arith.constant 0 : index
    %c0_101 = arith.constant 0 : index
    %c0_102 = arith.constant 0 : index
    %126 = vector.load %arg1[%c8, %c0_100, %c0_101, %c0_102] : memref<9x3x8x1xf32, #tpu.memory_space<vmem>>, vector<1x1x8x1xf32>
    %127 = vector.shape_cast %126 : vector<1x1x8x1xf32> to vector<8x1xf32>
    %128 = vector.broadcast %127 : vector<8x1xf32> to vector<8x256xf32>
    %129 = arith.mulf %125, %128 : vector<8x256xf32>
    %130 = arith.addf %114, %129 : vector<8x256xf32>
    %c8_103 = arith.constant 8 : index
    %c1_104 = arith.constant 1 : index
    %c0_105 = arith.constant 0 : index
    %c0_106 = arith.constant 0 : index
    %131 = vector.load %arg1[%c8_103, %c1_104, %c0_105, %c0_106] : memref<9x3x8x1xf32, #tpu.memory_space<vmem>>, vector<1x1x8x1xf32>
    %132 = vector.shape_cast %131 : vector<1x1x8x1xf32> to vector<8x1xf32>
    %133 = vector.broadcast %132 : vector<8x1xf32> to vector<8x256xf32>
    %134 = arith.mulf %125, %133 : vector<8x256xf32>
    %135 = arith.addf %119, %134 : vector<8x256xf32>
    %c8_107 = arith.constant 8 : index
    %c2_108 = arith.constant 2 : index
    %c0_109 = arith.constant 0 : index
    %c0_110 = arith.constant 0 : index
    %136 = vector.load %arg1[%c8_107, %c2_108, %c0_109, %c0_110] : memref<9x3x8x1xf32, #tpu.memory_space<vmem>>, vector<1x1x8x1xf32>
    %137 = vector.shape_cast %136 : vector<1x1x8x1xf32> to vector<8x1xf32>
    %138 = vector.broadcast %137 : vector<8x1xf32> to vector<8x256xf32>
    %139 = arith.mulf %125, %138 : vector<8x256xf32>
    %140 = arith.addf %124, %139 : vector<8x256xf32>
    %c0_111 = arith.constant 0 : index
    %c0_112 = arith.constant 0 : index
    %c0_113 = arith.constant 0 : index
    %141 = vector.load %arg2[%c0_111, %c0_112, %c0_113] : memref<3x8x1xf32, #tpu.memory_space<vmem>>, vector<1x8x1xf32>
    %142 = vector.shape_cast %141 : vector<1x8x1xf32> to vector<8x1xf32>
    %143 = vector.broadcast %142 : vector<8x1xf32> to vector<8x256xf32>
    %144 = arith.addf %130, %143 : vector<8x256xf32>
    %c0_114 = arith.constant 0 : index
    %c0_115 = arith.constant 0 : index
    %c0_116 = arith.constant 0 : index
    %145 = vector.load %arg3[%c0_114, %c0_115, %c0_116] : memref<3x8x256xf32, #tpu.memory_space<vmem>>, vector<1x8x256xf32>
    %146 = vector.shape_cast %145 : vector<1x8x256xf32> to vector<8x256xf32>
    %147 = vector.shape_cast %144 : vector<8x256xf32> to vector<1x8x256xf32>
    tpu.vector_store %arg3[%c0_114, %c0_115, %c0_116], %147 {strides = array<i32>} : memref<3x8x256xf32, #tpu.memory_space<vmem>>, vector<1x8x256xf32>,
    %c1_117 = arith.constant 1 : index
    %c0_118 = arith.constant 0 : index
    %c0_119 = arith.constant 0 : index
    %148 = vector.load %arg2[%c1_117, %c0_118, %c0_119] : memref<3x8x1xf32, #tpu.memory_space<vmem>>, vector<1x8x1xf32>
    %149 = vector.shape_cast %148 : vector<1x8x1xf32> to vector<8x1xf32>
    %150 = vector.broadcast %149 : vector<8x1xf32> to vector<8x256xf32>
    %151 = arith.addf %135, %150 : vector<8x256xf32>
    %c1_120 = arith.constant 1 : index
    %c0_121 = arith.constant 0 : index
    %c0_122 = arith.constant 0 : index
    %152 = vector.load %arg3[%c1_120, %c0_121, %c0_122] : memref<3x8x256xf32, #tpu.memory_space<vmem>>, vector<1x8x256xf32>
    %153 = vector.shape_cast %152 : vector<1x8x256xf32> to vector<8x256xf32>
    %154 = vector.shape_cast %151 : vector<8x256xf32> to vector<1x8x256xf32>
    tpu.vector_store %arg3[%c1_120, %c0_121, %c0_122], %154 {strides = array<i32>} : memref<3x8x256xf32, #tpu.memory_space<vmem>>, vector<1x8x256xf32>,
    %c2_123 = arith.constant 2 : index
    %c0_124 = arith.constant 0 : index
    %c0_125 = arith.constant 0 : index
    %155 = vector.load %arg2[%c2_123, %c0_124, %c0_125] : memref<3x8x1xf32, #tpu.memory_space<vmem>>, vector<1x8x1xf32>
    %156 = vector.shape_cast %155 : vector<1x8x1xf32> to vector<8x1xf32>
    %157 = vector.broadcast %156 : vector<8x1xf32> to vector<8x256xf32>
    %158 = arith.addf %140, %157 : vector<8x256xf32>
    %c2_126 = arith.constant 2 : index
    %c0_127 = arith.constant 0 : index
    %c0_128 = arith.constant 0 : index
    %159 = vector.load %arg3[%c2_126, %c0_127, %c0_128] : memref<3x8x256xf32, #tpu.memory_space<vmem>>, vector<1x8x256xf32>
    %160 = vector.shape_cast %159 : vector<1x8x256xf32> to vector<8x256xf32>
    %161 = vector.shape_cast %158 : vector<8x256xf32> to vector<1x8x256xf32>
    tpu.vector_store %arg3[%c2_126, %c0_127, %c0_128], %161 {strides = array<i32>} : memref<3x8x256xf32, #tpu.memory_space<vmem>>, vector<1x8x256xf32>,
    return
  }
}

</mosaic_0001>

<llo_original>
// kernel: tpu_custom_call.1
$region0: #{tpu_custom_call.1}
  #allocation0 [shape = 'u32[]', space=smem, size = 0x4, offset = 0x4, fixed_abs, tag = 'smem constant byte address 0x4 - core index']
  #allocation1 [shape = 'u32[144,128]{1,0:T(1,128)}', space=vmem, size = 0x12000, scoped, tag = 'internal scratch']
  %s0 = inlined_call_operand.vmem [shape: f32[8,290], index: 0, kind: input, shape index: {}]
  %s1 = inlined_call_operand.vmem [shape: f32[9,3,8,1], index: 1, kind: input, shape index: {}]
  %s2 = inlined_call_operand.vmem [shape: f32[3,8,1], index: 2, kind: input, shape index: {}]
  %s3 = inlined_call_operand.hbm [shape: f32[3,8,256], index: 3, kind: output, shape index: {}]
  %s4 = sld [smem:[#allocation0]]
  $region22: #{tpu_custom_call.1} parent=0
    _
  %s6 = ssub.s32 1, %s4
  %s7 = scalar_select 0, %s6, %s4
  $region1: #{tpu_custom_call.1} parent=0
    #allocation2 [shape = 'u8[24576]{0}', space=vmem, size = 0x6000, scoped, tag = 'output window, operand 0, single buffered']
    #allocation3 [shape = 's32[1]{0}', space=sflag, size = 0x4, scoped, tag = 'scoped memory for tpu_custom_call.1']
    %8 = vsyncpa [#allocation3], 0
    // Predicated region
    $region2: #{tpu_custom_call.1} parent=1 // pred_check
      _
    $region3: #{tpu_custom_call.1} parent=1 // pred_check_branch
      %10 = sbr.rel (0) target = $region5
    $region4: #{tpu_custom_call.1} parent=1 // pred_region
      _
    $region5: #{tpu_custom_call.1} parent=1 // pred_fallthru
      _
    // Predicated region
    $region6: #{tpu_custom_call.1} parent=1 // pred_check
      _
    $region7: #{tpu_custom_call.1} parent=1 // pred_check_branch
      %12 = sbr.rel (0) target = $region9
    $region8: #{tpu_custom_call.1} parent=1 // pred_region
      _
    $region9: #{tpu_custom_call.1} parent=1 // pred_fallthru
      _
    // Predicated region
    $region10: #{tpu_custom_call.1} parent=1 // pred_check
      _
    $region11: #{tpu_custom_call.1} parent=1 // pred_check_branch
      %14 = sbr.rel (0) target = $region13
    $region12: #{tpu_custom_call.1} parent=1 // pred_region
      _
    $region13: #{tpu_custom_call.1} parent=1 // pred_fallthru
      _
    %v15 = vld [vmem:[%s0] sm:$0xff]
    %v16 = vld [vmem:[%s0 + $0x8] sm:$0xff]
    %v17 = vld [vmem:[%s1] sm:$0xff]
    %19 = vset.pattern.permute.xlu0 0
    %20 = vperm.xlu0 %19, %v17
    %v21 = vpop.permute.xlu0 %20
    %v23 = vmul.f32 %v15, %v21
    %v24 = vmul.f32 %v16, %v21
    %s25 = scalar_lea.vmem %s1, 8
    %v26 = vld [vmem:[%s25] sm:$0xff]
    %28 = vset.pattern.permute.xlu0 0
    %29 = vperm.xlu0 %28, %v26
    %v30 = vpop.permute.xlu0 %29
    %v32 = vmul.f32 %v15, %v30
    %v33 = vmul.f32 %v16, %v30
    %s34 = scalar_lea.vmem %s1, 16
    %v35 = vld [vmem:[%s34] sm:$0xff]
    %37 = vset.pattern.permute.xlu0 0
    %38 = vperm.xlu0 %37, %v35
    %v39 = vpop.permute.xlu0 %38
    %v41 = vmul.f32 %v15, %v39
    %v42 = vmul.f32 %v16, %v39
    %v43 = vld [vmem:[%s0] sm:$0xff]
    %v44 = vld [vmem:[%s0 + $0x8] sm:$0xff]
    %v45 = vld [vmem:[%s0 + $0x10] sm:$0xff]
    %s46 = scalar_lea.vmem %s1, 24
    %v47 = vld [vmem:[%s46] sm:$0xff]
    %49 = vset.pattern.permute.xlu0 0
    %50 = vperm.xlu0 %49, %v47
    %v51 = vpop.permute.xlu0 %50
    %v53 = vmul.f32 %v43, %v51
    %v54 = vmul.f32 %v44, %v51
    %v55 = vmul.f32 %v45, %v51
    %59 = vrot.lane.b32.xlu0 %v53, 127
    %v60 = vpop.permute.xlu0 %59
    %61 = vrot.lane.b32.xlu0 %v54, 127
    %v62 = vpop.permute.xlu0 %61
    %63 = vrot.lane.b32.xlu0 %v55, 127
    %v64 = vpop.permute.xlu0 %63
    %vm65 = vcmask 1039360
    %v66 = vsel %vm65, %v60, %v62
    %v67 = vsel %vm65, %v62, %v64
    %v70 = vadd.f32 %v23, %v66
    %v71 = vadd.f32 %v24, %v67
    %s72 = scalar_lea.vmem %s1, 32
    %v73 = vld [vmem:[%s72] sm:$0xff]
    %75 = vset.pattern.permute.xlu0 0
    %76 = vperm.xlu0 %75, %v73
    %v77 = vpop.permute.xlu0 %76
    %v79 = vmul.f32 %v43, %v77
    %v80 = vmul.f32 %v44, %v77
    %v81 = vmul.f32 %v45, %v77
    %85 = vrot.lane.b32.xlu0 %v79, 127
    %v86 = vpop.permute.xlu0 %85
    %87 = vrot.lane.b32.xlu0 %v80, 127
    %v88 = vpop.permute.xlu0 %87
    %89 = vrot.lane.b32.xlu0 %v81, 127
    %v90 = vpop.permute.xlu0 %89
    %v91 = vsel %vm65, %v86, %v88
    %v92 = vsel %vm65, %v88, %v90
    %v95 = vadd.f32 %v32, %v91
    %v96 = vadd.f32 %v33, %v92
    %s97 = scalar_lea.vmem %s1, 40
    %v98 = vld [vmem:[%s97] sm:$0xff]
    %100 = vset.pattern.permute.xlu0 0
    %101 = vperm.xlu0 %100, %v98
    %v102 = vpop.permute.xlu0 %101
    %v104 = vmul.f32 %v43, %v102
    %v105 = vmul.f32 %v44, %v102
    %v106 = vmul.f32 %v45, %v102
    %110 = vrot.lane.b32.xlu0 %v104, 127
    %v111 = vpop.permute.xlu0 %110
    %112 = vrot.lane.b32.xlu0 %v105, 127
    %v113 = vpop.permute.xlu0 %112
    %114 = vrot.lane.b32.xlu0 %v106, 127
    %v115 = vpop.permute.xlu0 %114
    %v116 = vsel %vm65, %v111, %v113
    %v117 = vsel %vm65, %v113, %v115
    %v120 = vadd.f32 %v41, %v116
    %v121 = vadd.f32 %v42, %v117
    %s122 = scalar_lea.vmem %s1, 48
    %v123 = vld [vmem:[%s122] sm:$0xff]
    %125 = vset.pattern.permute.xlu0 0
    %126 = vperm.xlu0 %125, %v123
    %v127 = vpop.permute.xlu0 %126
    %v129 = vmul.f32 %v43, %v127
    %v130 = vmul.f32 %v44, %v127
    %v131 = vmul.f32 %v45, %v127
    %135 = vrot.lane.b32.xlu0 %v129, 126
    %v136 = vpop.permute.xlu0 %135
    %137 = vrot.lane.b32.xlu0 %v130, 126
    %v138 = vpop.permute.xlu0 %137
    %139 = vrot.lane.b32.xlu0 %v131, 126
    %v140 = vpop.permute.xlu0 %139
    %vm141 = vcmask 1031168
    %v142 = vsel %vm141, %v136, %v138
    %v143 = vsel %vm141, %v138, %v140
    %v146 = vadd.f32 %v70, %v142
    %v147 = vadd.f32 %v71, %v143
    %s148 = scalar_lea.vmem %s1, 56
    %v149 = vld [vmem:[%s148] sm:$0xff]
    %151 = vset.pattern.permute.xlu0 0
    %152 = vperm.xlu0 %151, %v149
    %v153 = vpop.permute.xlu0 %152
    %v155 = vmul.f32 %v43, %v153
    %v156 = vmul.f32 %v44, %v153
    %v157 = vmul.f32 %v45, %v153
    %161 = vrot.lane.b32.xlu0 %v155, 126
    %v162 = vpop.permute.xlu0 %161
    %163 = vrot.lane.b32.xlu0 %v156, 126
    %v164 = vpop.permute.xlu0 %163
    %165 = vrot.lane.b32.xlu0 %v157, 126
    %v166 = vpop.permute.xlu0 %165
    %v167 = vsel %vm141, %v162, %v164
    %v168 = vsel %vm141, %v164, %v166
    %v171 = vadd.f32 %v95, %v167
    %v172 = vadd.f32 %v96, %v168
    %s173 = scalar_lea.vmem %s1, 64
    %v174 = vld [vmem:[%s173] sm:$0xff]
    %176 = vset.pattern.permute.xlu0 0
    %177 = vperm.xlu0 %176, %v174
    %v178 = vpop.permute.xlu0 %177
    %v180 = vmul.f32 %v43, %v178
    %v181 = vmul.f32 %v44, %v178
    %v182 = vmul.f32 %v45, %v178
    %186 = vrot.lane.b32.xlu0 %v180, 126
    %v187 = vpop.permute.xlu0 %186
    %188 = vrot.lane.b32.xlu0 %v181, 126
    %v189 = vpop.permute.xlu0 %188
    %190 = vrot.lane.b32.xlu0 %v182, 126
    %v191 = vpop.permute.xlu0 %190
    %v192 = vsel %vm141, %v187, %v189
    %v193 = vsel %vm141, %v189, %v191
    %v196 = vadd.f32 %v120, %v192
    %v197 = vadd.f32 %v121, %v193
    %s198 = scalar_lea.vmem %s1, 72
    %v199 = vld [vmem:[%s198] sm:$0xff]
    %201 = vset.pattern.permute.xlu0 0
    %202 = vperm.xlu0 %201, %v199
    %v203 = vpop.permute.xlu0 %202
    %v205 = vmul.f32 %v43, %v203
    %v206 = vmul.f32 %v44, %v203
    %v207 = vmul.f32 %v45, %v203
    %211 = vrot.lane.b32.xlu0 %v205, 112
    %v212 = vpop.permute.xlu0 %211
    %213 = vrot.lane.b32.xlu0 %v206, 112
    %v214 = vpop.permute.xlu0 %213
    %215 = vrot.lane.b32.xlu0 %v207, 112
    %v216 = vpop.permute.xlu0 %215
    %vm217 = vcmask 916480
    %v218 = vsel %vm217, %v212, %v214
    %v219 = vsel %vm217, %v214, %v216
    %v222 = vadd.f32 %v146, %v218
    %v223 = vadd.f32 %v147, %v219
    %s224 = scalar_lea.vmem %s1, 80
    %v225 = vld [vmem:[%s224] sm:$0xff]
    %227 = vset.pattern.permute.xlu0 0
    %228 = vperm.xlu0 %227, %v225
    %v229 = vpop.permute.xlu0 %228
    %v231 = vmul.f32 %v43, %v229
    %v232 = vmul.f32 %v44, %v229
    %v233 = vmul.f32 %v45, %v229
    %237 = vrot.lane.b32.xlu0 %v231, 112
    %v238 = vpop.permute.xlu0 %237
    %239 = vrot.lane.b32.xlu0 %v232, 112
    %v240 = vpop.permute.xlu0 %239
    %241 = vrot.lane.b32.xlu0 %v233, 112
    %v242 = vpop.permute.xlu0 %241
    %v243 = vsel %vm217, %v238, %v240
    %v244 = vsel %vm217, %v240, %v242
    %v247 = vadd.f32 %v171, %v243
    %v248 = vadd.f32 %v172, %v244
    %s249 = scalar_lea.vmem %s1, 88
    %v250 = vld [vmem:[%s249] sm:$0xff]
    %252 = vset.pattern.permute.xlu0 0
    %253 = vperm.xlu0 %252, %v250
    %v254 = vpop.permute.xlu0 %253
    %v256 = vmul.f32 %v43, %v254
    %v257 = vmul.f32 %v44, %v254
    %v258 = vmul.f32 %v45, %v254
    %262 = vrot.lane.b32.xlu0 %v256, 112
    %v263 = vpop.permute.xlu0 %262
    %264 = vrot.lane.b32.xlu0 %v257, 112
    %v265 = vpop.permute.xlu0 %264
    %266 = vrot.lane.b32.xlu0 %v258, 112
    %v267 = vpop.permute.xlu0 %266
    %v268 = vsel %vm217, %v263, %v265
    %v269 = vsel %vm217, %v265, %v267
    %v272 = vadd.f32 %v196, %v268
    %v273 = vadd.f32 %v197, %v269
    %s274 = scalar_lea.vmem %s1, 96
    %v275 = vld [vmem:[%s274] sm:$0xff]
    %277 = vset.pattern.permute.xlu0 0
    %278 = vperm.xlu0 %277, %v275
    %v279 = vpop.permute.xlu0 %278
    %v281 = vmul.f32 %v43, %v279
    %v282 = vmul.f32 %v44, %v279
    %v283 = vmul.f32 %v45, %v279
    %287 = vrot.lane.b32.xlu0 %v281, 111
    %v288 = vpop.permute.xlu0 %287
    %289 = vrot.lane.b32.xlu0 %v282, 111
    %v290 = vpop.permute.xlu0 %289
    %291 = vrot.lane.b32.xlu0 %v283, 111
    %v292 = vpop.permute.xlu0 %291
    %vm293 = vcmask 908288
    %v294 = vsel %vm293, %v288, %v290
    %v295 = vsel %vm293, %v290, %v292
    %v298 = vadd.f32 %v222, %v294
    %v299 = vadd.f32 %v223, %v295
    %s300 = scalar_lea.vmem %s1, 104
    %v301 = vld [vmem:[%s300] sm:$0xff]
    %303 = vset.pattern.permute.xlu0 0
    %304 = vperm.xlu0 %303, %v301
    %v305 = vpop.permute.xlu0 %304
    %v307 = vmul.f32 %v43, %v305
    %v308 = vmul.f32 %v44, %v305
    %v309 = vmul.f32 %v45, %v305
    %313 = vrot.lane.b32.xlu0 %v307, 111
    %v314 = vpop.permute.xlu0 %313
    %315 = vrot.lane.b32.xlu0 %v308, 111
    %v316 = vpop.permute.xlu0 %315
    %317 = vrot.lane.b32.xlu0 %v309, 111
    %v318 = vpop.permute.xlu0 %317
    %v319 = vsel %vm293, %v314, %v316
    %v320 = vsel %vm293, %v316, %v318
    %v323 = vadd.f32 %v247, %v319
    %v324 = vadd.f32 %v248, %v320
    %s325 = scalar_lea.vmem %s1, 112
    %v326 = vld [vmem:[%s325] sm:$0xff]
    %328 = vset.pattern.permute.xlu0 0
    %329 = vperm.xlu0 %328, %v326
    %v330 = vpop.permute.xlu0 %329
    %v332 = vmul.f32 %v43, %v330
    %v333 = vmul.f32 %v44, %v330
    %v334 = vmul.f32 %v45, %v330
    %338 = vrot.lane.b32.xlu0 %v332, 111
    %v339 = vpop.permute.xlu0 %338
    %340 = vrot.lane.b32.xlu0 %v333, 111
    %v341 = vpop.permute.xlu0 %340
    %342 = vrot.lane.b32.xlu0 %v334, 111
    %v343 = vpop.permute.xlu0 %342
    %v344 = vsel %vm293, %v339, %v341
    %v345 = vsel %vm293, %v341, %v343
    %v348 = vadd.f32 %v272, %v344
    %v349 = vadd.f32 %v273, %v345
    %s350 = scalar_lea.vmem %s1, 120
    %v351 = vld [vmem:[%s350] sm:$0xff]
    %353 = vset.pattern.permute.xlu0 0
    %354 = vperm.xlu0 %353, %v351
    %v355 = vpop.permute.xlu0 %354
    %v357 = vmul.f32 %v43, %v355
    %v358 = vmul.f32 %v44, %v355
    %v359 = vmul.f32 %v45, %v355
    %363 = vrot.lane.b32.xlu0 %v357, 110
    %v364 = vpop.permute.xlu0 %363
    %365 = vrot.lane.b32.xlu0 %v358, 110
    %v366 = vpop.permute.xlu0 %365
    %367 = vrot.lane.b32.xlu0 %v359, 110
    %v368 = vpop.permute.xlu0 %367
    %vm369 = vcmask 900096
    %v370 = vsel %vm369, %v364, %v366
    %v371 = vsel %vm369, %v366, %v368
    %v374 = vadd.f32 %v298, %v370
    %v375 = vadd.f32 %v299, %v371
    %s376 = scalar_lea.vmem %s1, 128
    %v377 = vld [vmem:[%s376] sm:$0xff]
    %379 = vset.pattern.permute.xlu0 0
    %380 = vperm.xlu0 %379, %v377
    %v381 = vpop.permute.xlu0 %380
    %v383 = vmul.f32 %v43, %v381
    %v384 = vmul.f32 %v44, %v381
    %v385 = vmul.f32 %v45, %v381
    %389 = vrot.lane.b32.xlu0 %v383, 110
    %v390 = vpop.permute.xlu0 %389
    %391 = vrot.lane.b32.xlu0 %v384, 110
    %v392 = vpop.permute.xlu0 %391
    %393 = vrot.lane.b32.xlu0 %v385, 110
    %v394 = vpop.permute.xlu0 %393
    %v395 = vsel %vm369, %v390, %v392
    %v396 = vsel %vm369, %v392, %v394
    %v399 = vadd.f32 %v323, %v395
    %v400 = vadd.f32 %v324, %v396
    %s401 = scalar_lea.vmem %s1, 136
    %v402 = vld [vmem:[%s401] sm:$0xff]
    %404 = vset.pattern.permute.xlu0 0
    %405 = vperm.xlu0 %404, %v402
    %v406 = vpop.permute.xlu0 %405
    %v408 = vmul.f32 %v43, %v406
    %v409 = vmul.f32 %v44, %v406
    %v410 = vmul.f32 %v45, %v406
    %414 = vrot.lane.b32.xlu0 %v408, 110
    %v415 = vpop.permute.xlu0 %414
    %416 = vrot.lane.b32.xlu0 %v409, 110
    %v417 = vpop.permute.xlu0 %416
    %418 = vrot.lane.b32.xlu0 %v410, 110
    %v419 = vpop.permute.xlu0 %418
    %v420 = vsel %vm369, %v415, %v417
    %v421 = vsel %vm369, %v417, %v419
    %v424 = vadd.f32 %v348, %v420
    %v425 = vadd.f32 %v349, %v421
    %s426 = scalar_lea.vmem %s1, 144
    %v427 = vld [vmem:[%s426] sm:$0xff]
    %429 = vset.pattern.permute.xlu0 0
    %430 = vperm.xlu0 %429, %v427
    %v431 = vpop.permute.xlu0 %430
    %v433 = vmul.f32 %v43, %v431
    %v434 = vmul.f32 %v44, %v431
    %v435 = vmul.f32 %v45, %v431
    %439 = vrot.lane.b32.xlu0 %v433, 96
    %v440 = vpop.permute.xlu0 %439
    %441 = vrot.lane.b32.xlu0 %v434, 96
    %v442 = vpop.permute.xlu0 %441
    %443 = vrot.lane.b32.xlu0 %v435, 96
    %v444 = vpop.permute.xlu0 %443
    %vm445 = vcmask 785408
    %v446 = vsel %vm445, %v440, %v442
    %v447 = vsel %vm445, %v442, %v444
    %v450 = vadd.f32 %v374, %v446
    %v451 = vadd.f32 %v375, %v447
    %s452 = scalar_lea.vmem %s1, 152
    %v453 = vld [vmem:[%s452] sm:$0xff]
    %455 = vset.pattern.permute.xlu0 0
    %456 = vperm.xlu0 %455, %v453
    %v457 = vpop.permute.xlu0 %456
    %v459 = vmul.f32 %v43, %v457
    %v460 = vmul.f32 %v44, %v457
    %v461 = vmul.f32 %v45, %v457
    %465 = vrot.lane.b32.xlu0 %v459, 96
    %v466 = vpop.permute.xlu0 %465
    %467 = vrot.lane.b32.xlu0 %v460, 96
    %v468 = vpop.permute.xlu0 %467
    %469 = vrot.lane.b32.xlu0 %v461, 96
    %v470 = vpop.permute.xlu0 %469
    %v471 = vsel %vm445, %v466, %v468
    %v472 = vsel %vm445, %v468, %v470
    %v475 = vadd.f32 %v399, %v471
    %v476 = vadd.f32 %v400, %v472
    %s477 = scalar_lea.vmem %s1, 160
    %v478 = vld [vmem:[%s477] sm:$0xff]
    %480 = vset.pattern.permute.xlu0 0
    %481 = vperm.xlu0 %480, %v478
    %v482 = vpop.permute.xlu0 %481
    %v484 = vmul.f32 %v43, %v482
    %v485 = vmul.f32 %v44, %v482
    %v486 = vmul.f32 %v45, %v482
    %490 = vrot.lane.b32.xlu0 %v484, 96
    %v491 = vpop.permute.xlu0 %490
    %492 = vrot.lane.b32.xlu0 %v485, 96
    %v493 = vpop.permute.xlu0 %492
    %494 = vrot.lane.b32.xlu0 %v486, 96
    %v495 = vpop.permute.xlu0 %494
    %v496 = vsel %vm445, %v491, %v493
    %v497 = vsel %vm445, %v493, %v495
    %v500 = vadd.f32 %v424, %v496
    %v501 = vadd.f32 %v425, %v497
    %s502 = scalar_lea.vmem %s1, 168
    %v503 = vld [vmem:[%s502] sm:$0xff]
    %505 = vset.pattern.permute.xlu0 0
    %506 = vperm.xlu0 %505, %v503
    %v507 = vpop.permute.xlu0 %506
    %v509 = vmul.f32 %v43, %v507
    %v510 = vmul.f32 %v44, %v507
    %v511 = vmul.f32 %v45, %v507
    %515 = vrot.lane.b32.xlu0 %v509, 95
    %v516 = vpop.permute.xlu0 %515
    %517 = vrot.lane.b32.xlu0 %v510, 95
    %v518 = vpop.permute.xlu0 %517
    %519 = vrot.lane.b32.xlu0 %v511, 95
    %v520 = vpop.permute.xlu0 %519
    %vm521 = vcmask 777216
    %v522 = vsel %vm521, %v516, %v518
    %v523 = vsel %vm521, %v518, %v520
    %v526 = vadd.f32 %v450, %v522
    %v527 = vadd.f32 %v451, %v523
    %s528 = scalar_lea.vmem %s1, 176
    %v529 = vld [vmem:[%s528] sm:$0xff]
    %531 = vset.pattern.permute.xlu0 0
    %532 = vperm.xlu0 %531, %v529
    %v533 = vpop.permute.xlu0 %532
    %v535 = vmul.f32 %v43, %v533
    %v536 = vmul.f32 %v44, %v533
    %v537 = vmul.f32 %v45, %v533
    %541 = vrot.lane.b32.xlu0 %v535, 95
    %v542 = vpop.permute.xlu0 %541
    %543 = vrot.lane.b32.xlu0 %v536, 95
    %v544 = vpop.permute.xlu0 %543
    %545 = vrot.lane.b32.xlu0 %v537, 95
    %v546 = vpop.permute.xlu0 %545
    %v547 = vsel %vm521, %v542, %v544
    %v548 = vsel %vm521, %v544, %v546
    %v551 = vadd.f32 %v475, %v547
    %v552 = vadd.f32 %v476, %v548
    %s553 = scalar_lea.vmem %s1, 184
    %v554 = vld [vmem:[%s553] sm:$0xff]
    %556 = vset.pattern.permute.xlu0 0
    %557 = vperm.xlu0 %556, %v554
    %v558 = vpop.permute.xlu0 %557
    %v560 = vmul.f32 %v43, %v558
    %v561 = vmul.f32 %v44, %v558
    %v562 = vmul.f32 %v45, %v558
    %566 = vrot.lane.b32.xlu0 %v560, 95
    %v567 = vpop.permute.xlu0 %566
    %568 = vrot.lane.b32.xlu0 %v561, 95
    %v569 = vpop.permute.xlu0 %568
    %570 = vrot.lane.b32.xlu0 %v562, 95
    %v571 = vpop.permute.xlu0 %570
    %v572 = vsel %vm521, %v567, %v569
    %v573 = vsel %vm521, %v569, %v571
    %v576 = vadd.f32 %v500, %v572
    %v577 = vadd.f32 %v501, %v573
    %s578 = scalar_lea.vmem %s1, 192
    %v579 = vld [vmem:[%s578] sm:$0xff]
    %581 = vset.pattern.permute.xlu0 0
    %582 = vperm.xlu0 %581, %v579
    %v583 = vpop.permute.xlu0 %582
    %v585 = vmul.f32 %v43, %v583
    %v586 = vmul.f32 %v44, %v583
    %v587 = vmul.f32 %v45, %v583
    %591 = vrot.lane.b32.xlu0 %v585, 94
    %v592 = vpop.permute.xlu0 %591
    %593 = vrot.lane.b32.xlu0 %v586, 94
    %v594 = vpop.permute.xlu0 %593
    %595 = vrot.lane.b32.xlu0 %v587, 94
    %v596 = vpop.permute.xlu0 %595
    %vm597 = vcmask 769024
    %v598 = vsel %vm597, %v592, %v594
    %v599 = vsel %vm597, %v594, %v596
    %v602 = vadd.f32 %v526, %v598
    %v603 = vadd.f32 %v527, %v599
    %s604 = scalar_lea.vmem %s1, 200
    %v605 = vld [vmem:[%s604] sm:$0xff]
    %607 = vset.pattern.permute.xlu0 0
    %608 = vperm.xlu0 %607, %v605
    %v609 = vpop.permute.xlu0 %608
    %v611 = vmul.f32 %v43, %v609
    %v612 = vmul.f32 %v44, %v609
    %v613 = vmul.f32 %v45, %v609
    %617 = vrot.lane.b32.xlu0 %v611, 94
    %v618 = vpop.permute.xlu0 %617
    %619 = vrot.lane.b32.xlu0 %v612, 94
    %v620 = vpop.permute.xlu0 %619
    %621 = vrot.lane.b32.xlu0 %v613, 94
    %v622 = vpop.permute.xlu0 %621
    %v623 = vsel %vm597, %v618, %v620
    %v624 = vsel %vm597, %v620, %v622
    %v627 = vadd.f32 %v551, %v623
    %v628 = vadd.f32 %v552, %v624
    %s629 = scalar_lea.vmem %s1, 208
    %v630 = vld [vmem:[%s629] sm:$0xff]
    %632 = vset.pattern.permute.xlu0 0
    %633 = vperm.xlu0 %632, %v630
    %v634 = vpop.permute.xlu0 %633
    %v636 = vmul.f32 %v43, %v634
    %v637 = vmul.f32 %v44, %v634
    %v638 = vmul.f32 %v45, %v634
    %642 = vrot.lane.b32.xlu0 %v636, 94
    %v643 = vpop.permute.xlu0 %642
    %644 = vrot.lane.b32.xlu0 %v637, 94
    %v645 = vpop.permute.xlu0 %644
    %646 = vrot.lane.b32.xlu0 %v638, 94
    %v647 = vpop.permute.xlu0 %646
    %v648 = vsel %vm597, %v643, %v645
    %v649 = vsel %vm597, %v645, %v647
    %v652 = vadd.f32 %v576, %v648
    %v653 = vadd.f32 %v577, %v649
    %v654 = vld [vmem:[%s2] sm:$0xff]
    %656 = vset.pattern.permute.xlu0 0
    %657 = vperm.xlu0 %656, %v654
    %v658 = vpop.permute.xlu0 %657
    %v660 = vadd.f32 %v602, %v658
    %v661 = vadd.f32 %v603, %v658
    %662 = vst [vmem:[#allocation2] sm:$0xff] %v660
    %663 = vst [vmem:[#allocation2 + $0x8] sm:$0xff] %v661
    %s664 = scalar_lea.vmem %s2, 8
    %v665 = vld [vmem:[%s664] sm:$0xff]
    %667 = vset.pattern.permute.xlu0 0
    %668 = vperm.xlu0 %667, %v665
    %v669 = vpop.permute.xlu0 %668
    %v671 = vadd.f32 %v627, %v669
    %v672 = vadd.f32 %v628, %v669
    %s673 = scalar_lea.vmem [#allocation2], 16
    %674 = vst [vmem:[%s673] sm:$0xff] %v671
    %675 = vst [vmem:[%s673 + $0x8] sm:$0xff] %v672
    %s676 = scalar_lea.vmem %s2, 16
    %v677 = vld [vmem:[%s676] sm:$0xff]
    %679 = vset.pattern.permute.xlu0 0
    %680 = vperm.xlu0 %679, %v677
    %v681 = vpop.permute.xlu0 %680
    %v683 = vadd.f32 %v652, %v681
    %v684 = vadd.f32 %v653, %v681
    %s685 = scalar_lea.vmem [#allocation2], 32
    %686 = vst [vmem:[%s685] sm:$0xff] %v683
    %687 = vst [vmem:[%s685 + $0x8] sm:$0xff] %v684
    // Predicated region
    $region14: #{tpu_custom_call.1} parent=1 // pred_check
      _
    $region15: #{tpu_custom_call.1} parent=1 // pred_check_branch
      %689 = sbr.rel (0) target = $region17
    $region16: #{tpu_custom_call.1} parent=1 // pred_region
      %s691 = ssub.s32 768, 768
      %692 = vsyncadd [#allocation3], %s691
      %s693 = sshll.u32 [#allocation2], 4
      %s694 = int_to_ptr.vmem [resolvable:$true] %s693
      %699 = dma.vmem_to_hbm [thread:$0]  %s694, 768, %s3, [#allocation3], 256, 256, 16
    $region17: #{tpu_custom_call.1} parent=1 // pred_fallthru
      _
    // Predicated region
    $region18: #{tpu_custom_call.1} parent=1 // pred_check
      _
    $region19: #{tpu_custom_call.1} parent=1 // pred_check_branch
      %701 = sbr.rel (0) target = $region21
    $region20: #{tpu_custom_call.1} parent=1 // pred_region
      %702 = dma.done [#allocation3], 768
    $region21: #{tpu_custom_call.1} parent=1 // pred_fallthru
      _
    %703 = vsyncpa [#allocation3], 1

</llo_original>
